<compile_context>
chip_gen: v7x
topology: tpu7x:2x2x1
jax: 0.10.0
libtpu: 0.0.40
codegen_flags: <defaults>
</compile_context>

<pallas_src>
import functools

import jax
import jax.numpy as jnp
from jax.experimental import pallas as pl
from jax.experimental.pallas import tpu as pltpu

LANE = 128       # vreg lane width
SUBLANE = 8      # f32 sublane count
_MiB = 1024 * 1024
# Conservative total-VMEM target; fits v7x's 64 MiB physical VMEM and the
# 32 MiB scoped defaults on v6e/v7x (the scoped limit is raised explicitly).
_VMEM_TARGET = 40 * _MiB
_MAX_TILE_M = 1024


def _round_up(x, m):
    return (x + m - 1) // m * m


# ----------------------------------------------------------------------------
# Fused kernel: one batch tile flows through every Linear(+tanh) layer.
#   refs = (x_ref, w0, b0, w1, b1, ..., o_ref)
#     x_ref : (TM, F0P)   bf16, streamed per grid step (double-buffered)
#     w_l   : (FIP, FOP)  bf16, VMEM-resident (constant index, single buffer)
#     b_l   : (1, FOP)    f32,  VMEM-resident
#     o_ref : (TM, F)     f32,  streamed per grid step
# Static Python unroll over layers (L is tiny); activations never leave
# vregs/VMEM.  bf16 MXU matmuls, f32 accumulation, f32 bias add + tanh.
# ----------------------------------------------------------------------------
def _fused_ae_kernel(*refs, n_layers, out_features):
    x_ref, o_ref = refs[0], refs[-1]
    layer_refs = refs[1:-1]

    h = x_ref[...]                                        # (TM, F0P) bf16
    for layer in range(n_layers):
        w_ref = layer_refs[2 * layer]
        b_ref = layer_refs[2 * layer + 1]
        y = jnp.dot(h, w_ref[...], preferred_element_type=jnp.float32)
        y = y + b_ref[...]                                # f32 bias add
        if layer < n_layers - 1:                          # tanh on all but last Linear
            h = jnp.tanh(y).astype(jnp.bfloat16)          # f32 tanh (EUP) -> bf16 for MXU
        else:
            h = y                                         # final Linear: no activation
    # Write only the real features; padded batch rows of the last grid step
    # are masked out by Pallas' boundary handling.
    o_ref[...] = h[:, :out_features].astype(o_ref.dtype)


# ----------------------------------------------------------------------------
# Parameters mirroring AutoencoderDetector._build_model:
#   encoder sizes: [input_size] + hidden_layers        (Linear + tanh each)
#   decoder sizes: hidden_layers[::-1] + [input_size]  (last Linear: no act)
# ----------------------------------------------------------------------------
def init_autoencoder_params(key, input_size, hidden_layers):
    enc_sizes = [input_size] + list(hidden_layers)
    dec_sizes = list(hidden_layers[::-1]) + [input_size]

    def make_layers(sizes, key):
        layers = []
        for i in range(1, len(sizes)):
            fan_in, fan_out = sizes[i - 1], sizes[i]
            key, kw, kb = jax.random.split(key, 3)
            bound = 1.0 / (fan_in ** 0.5)
            w = jax.random.uniform(kw, (fan_in, fan_out), jnp.float32, -bound, bound)
            b = jax.random.uniform(kb, (fan_out,), jnp.float32, -bound, bound)
            layers.append((w, b))
        return layers, key

    enc, key = make_layers(enc_sizes, key)
    dec, key = make_layers(dec_sizes, key)
    return {"encoder": enc, "decoder": dec}


def pack_params(params):
    """Pad each layer's (W, b) to its own lane-aligned shape, W in bf16.

    Call ONCE outside the hot loop.  Consecutive layers get matching padded
    widths automatically (fan_in[l] == fan_out[l-1]); padded rows/cols are
    zero so the extra lanes stay exactly 0 through the whole chain.
    """
    layers = list(params["encoder"]) + list(params["decoder"])
    ws, bs = [], []
    for (w, b) in layers:
        fan_in, fan_out = w.shape
        fi_pad = _round_up(fan_in, LANE)
        fo_pad = _round_up(fan_out, LANE)
        wp = jnp.zeros((fi_pad, fo_pad), jnp.float32).at[:fan_in, :fan_out].set(w)
        bp = jnp.zeros((1, fo_pad), jnp.float32).at[0, :fan_out].set(b)
        ws.append(wp.astype(jnp.bfloat16))   # bf16 MXU inputs, half the HBM/VMEM bytes
        bs.append(bp)                        # bias stays f32
    return tuple(ws), tuple(bs)


@functools.partial(jax.jit, static_argnames=("max_tile_m",))
def autoencoder_apply(x, ws, bs, *, max_tile_m=_MAX_TILE_M):
    """Reproduces AutoencoderDetector.forward: decoder(encoder(x)), f32 in/out."""
    M, F = x.shape
    n_layers = len(ws)
    f0_pad = ws[0].shape[0]
    assert F <= f0_pad and ws[-1].shape[1] >= F

    # Pad only the feature dim (cheap); the batch remainder is handled by the
    # cdiv grid (garbage rows only affect their own masked-out output rows).
    x_p = jnp.pad(x, ((0, 0), (0, f0_pad - F))).astype(jnp.bfloat16)

    # ---- VMEM budget: weights resident (single-buffered), tiles streamed. ----
    resident = sum(int(w.size) * w.dtype.itemsize for w in ws) \
             + sum(int(b.size) * b.dtype.itemsize for b in bs)
    max_width = max(max(w.shape) for w in ws)
    bytes_per_row = (2 * f0_pad * 2          # double-buffered bf16 input tile
                     + 2 * F * 4             # double-buffered f32 output tile
                     + 2 * max_width * 4)    # live f32 activation headroom
    budget_rows = max((_VMEM_TARGET - resident) // bytes_per_row, SUBLANE)
    tm = int(min(budget_rows, max_tile_m, _round_up(M, SUBLANE)))
    if M > SUBLANE:   # keep >= 2 batch tiles so both v7x TensorCores get work
        tm = min(tm, _round_up(pl.cdiv(M, 2), SUBLANE))
    tm = max(SUBLANE, (tm // SUBLANE) * SUBLANE)
    grid_m = pl.cdiv(M, tm)

    footprint = resident + tm * bytes_per_row
    vmem_limit = int(min(64 * _MiB, max(16 * _MiB, 2 * footprint)))

    # Resident params: constant block index across the grid -> single buffer.
    def resident_spec(shape):
        return pl.BlockSpec(shape, lambda i: (0, 0), pipeline_mode=pl.Buffered(1))

    in_specs = [pl.BlockSpec((tm, f0_pad), lambda i: (i, 0))]
    flat_params = []
    for w, b in zip(ws, bs):
        in_specs.append(resident_spec(w.shape))
        in_specs.append(resident_spec(b.shape))
        flat_params += [w, b]

    cost = pl.CostEstimate(
        flops=int(2 * M * sum(w.shape[0] * w.shape[1] for w in ws)),
        transcendentals=int(M * sum(w.shape[1] for w in ws[:-1])),
        bytes_accessed=int(x_p.size * x_p.dtype.itemsize + M * F * 4 + resident),
    )

    kernel = functools.partial(_fused_ae_kernel, n_layers=n_layers, out_features=F)
    out = pl.pallas_call(
        kernel,
        out_shape=jax.ShapeDtypeStruct((M, F), jnp.float32),
        grid=(grid_m,),
        in_specs=in_specs,
        out_specs=pl.BlockSpec((tm, F), lambda i: (i, 0)),
        compiler_params=pltpu.CompilerParams(
            dimension_semantics=("parallel",),   # shard batch tiles across TCs (v7x)
            vmem_limit_bytes=vmem_limit,
        ),
        cost_estimate=cost,
    )(x_p, *flat_params)
    return out


if __name__ == "__main__":
    key = jax.random.PRNGKey(0)
    batch = 64
    input_size = 32
    hidden_layers = [16, 8]

    k_params, k_x = jax.random.split(key)
    params = init_autoencoder_params(k_params, input_size, hidden_layers)
    # Inputs emulate MinMax-scaled data in [-1, 1] (feature_range=(-1, 1)).
    x = jax.random.uniform(k_x, (batch, input_size), jnp.float32, -1.0, 1.0)

    # Pack ONCE (weights padded per-layer + cast to bf16); jit'ed forward.
    ws, bs = pack_params(params)
    recon = autoencoder_apply(x, ws, bs)
    recon = jax.block_until_ready(recon)

    assert recon.shape == (batch, input_size), recon.shape
    assert recon.dtype == jnp.float32

    layers = list(params["encoder"]) + list(params["decoder"])

    # Matched-precision reference (bf16 inputs, f32 accumulation/tanh) — tight.
    def ref_bf16(x):
        h = x.astype(jnp.bfloat16)
        for i, (w, b) in enumerate(layers):
            y = jnp.dot(h, w.astype(jnp.bfloat16),
                        preferred_element_type=jnp.float32) + b
            h = jnp.tanh(y).astype(jnp.bfloat16) if i < len(layers) - 1 else y
        return h

    # Full-f32 reference (the PyTorch semantics) — loose (bf16 quantization).
    def ref_f32(x):
        h = x
        for i, (w, b) in enumerate(layers):
            h = h @ w + b
            if i < len(layers) - 1:
                h = jnp.tanh(h)
        return h

    err_matched = float(jnp.max(jnp.abs(recon - ref_bf16(x))))
    err_f32 = float(jnp.max(jnp.abs(recon - ref_f32(x))))
    assert err_matched < 2e-3, err_matched
    assert err_f32 < 1e-1, err_f32

    print("KERNEL_OK")
</pallas_src>

<mosaic_0001>
module attributes {stable_mosaic.version = 11 : i64} {
  func.func @_fused_ae_kernel(%arg0: i32, %arg1: memref<32x128xbf16, #tpu.memory_space<vmem>>, %arg2: memref<128x128xbf16, #tpu.memory_space<vmem>>, %arg3: memref<1x128xf32, #tpu.memory_space<vmem>>, %arg4: memref<128x128xbf16, #tpu.memory_space<vmem>>, %arg5: memref<1x128xf32, #tpu.memory_space<vmem>>, %arg6: memref<128x128xbf16, #tpu.memory_space<vmem>>, %arg7: memref<1x128xf32, #tpu.memory_space<vmem>>, %arg8: memref<128x128xbf16, #tpu.memory_space<vmem>>, %arg9: memref<1x128xf32, #tpu.memory_space<vmem>>, %arg10: memref<32x32xf32, #tpu.memory_space<vmem>>) attributes {dimension_semantics = [#tpu.dimension_semantics<parallel>], iteration_bounds = array<i64: 2>, scalar_prefetch = 0 : i64, scratch_operands = 0 : i64, tpu.core_type = #tpu.core_type<tc>, window_params = [{transform_indices = @transform_0, window_bounds = array<i64: 32, 128>}, {pipeline_mode = #tpu.pipeline_mode<synchronous>, transform_indices = @transform_1, window_bounds = array<i64: 128, 128>}, {pipeline_mode = #tpu.pipeline_mode<synchronous>, transform_indices = @transform_2, window_bounds = array<i64: 1, 128>}, {pipeline_mode = #tpu.pipeline_mode<synchronous>, transform_indices = @transform_3, window_bounds = array<i64: 128, 128>}, {pipeline_mode = #tpu.pipeline_mode<synchronous>, transform_indices = @transform_4, window_bounds = array<i64: 1, 128>}, {pipeline_mode = #tpu.pipeline_mode<synchronous>, transform_indices = @transform_5, window_bounds = array<i64: 128, 128>}, {pipeline_mode = #tpu.pipeline_mode<synchronous>, transform_indices = @transform_6, window_bounds = array<i64: 1, 128>}, {pipeline_mode = #tpu.pipeline_mode<synchronous>, transform_indices = @transform_7, window_bounds = array<i64: 128, 128>}, {pipeline_mode = #tpu.pipeline_mode<synchronous>, transform_indices = @transform_8, window_bounds = array<i64: 1, 128>}, {transform_indices = @transform_9, window_bounds = array<i64: 32, 32>}]} {
    %c0 = arith.constant 0 : index
    %c0_0 = arith.constant 0 : index
    %0 = vector.load %arg1[%c0, %c0_0] : memref<32x128xbf16, #tpu.memory_space<vmem>>, vector<32x128xbf16>
    %c0_1 = arith.constant 0 : index
    %c0_2 = arith.constant 0 : index
    %1 = vector.load %arg2[%c0_1, %c0_2] : memref<128x128xbf16, #tpu.memory_space<vmem>>, vector<128x128xbf16>
    %cst = arith.constant dense<0.000000e+00> : vector<32x128xf32>
    %2 = tpu.matmul %0, %1, %cst {dimension_numbers = #tpu.dot_dimension_numbers<[1], [0], [0], [1], [0, 0, 1, 1], [], []>} : vector<32x128xbf16>, vector<128x128xbf16>, vector<32x128xf32> -> vector<32x128xf32>
    %c0_3 = arith.constant 0 : index
    %c0_4 = arith.constant 0 : index
    %3 = vector.load %arg3[%c0_3, %c0_4] : memref<1x128xf32, #tpu.memory_space<vmem>>, vector<1x128xf32>
    %4 = vector.broadcast %3 : vector<1x128xf32> to vector<32x128xf32>
    %5 = arith.addf %2, %4 : vector<32x128xf32>
    %6 = math.tanh %5 : vector<32x128xf32>
    %7 = arith.truncf %6 : vector<32x128xf32> to vector<32x128xbf16>
    %c0_5 = arith.constant 0 : index
    %c0_6 = arith.constant 0 : index
    %8 = vector.load %arg4[%c0_5, %c0_6] : memref<128x128xbf16, #tpu.memory_space<vmem>>, vector<128x128xbf16>
    %cst_7 = arith.constant dense<0.000000e+00> : vector<32x128xf32>
    %9 = tpu.matmul %7, %8, %cst_7 {dimension_numbers = #tpu.dot_dimension_numbers<[1], [0], [0], [1], [0, 0, 1, 1], [], []>} : vector<32x128xbf16>, vector<128x128xbf16>, vector<32x128xf32> -> vector<32x128xf32>
    %c0_8 = arith.constant 0 : index
    %c0_9 = arith.constant 0 : index
    %10 = vector.load %arg5[%c0_8, %c0_9] : memref<1x128xf32, #tpu.memory_space<vmem>>, vector<1x128xf32>
    %11 = vector.broadcast %10 : vector<1x128xf32> to vector<32x128xf32>
    %12 = arith.addf %9, %11 : vector<32x128xf32>
    %13 = math.tanh %12 : vector<32x128xf32>
    %14 = arith.truncf %13 : vector<32x128xf32> to vector<32x128xbf16>
    %c0_10 = arith.constant 0 : index
    %c0_11 = arith.constant 0 : index
    %15 = vector.load %arg6[%c0_10, %c0_11] : memref<128x128xbf16, #tpu.memory_space<vmem>>, vector<128x128xbf16>
    %cst_12 = arith.constant dense<0.000000e+00> : vector<32x128xf32>
    %16 = tpu.matmul %14, %15, %cst_12 {dimension_numbers = #tpu.dot_dimension_numbers<[1], [0], [0], [1], [0, 0, 1, 1], [], []>} : vector<32x128xbf16>, vector<128x128xbf16>, vector<32x128xf32> -> vector<32x128xf32>
    %c0_13 = arith.constant 0 : index
    %c0_14 = arith.constant 0 : index
    %17 = vector.load %arg7[%c0_13, %c0_14] : memref<1x128xf32, #tpu.memory_space<vmem>>, vector<1x128xf32>
    %18 = vector.broadcast %17 : vector<1x128xf32> to vector<32x128xf32>
    %19 = arith.addf %16, %18 : vector<32x128xf32>
    %20 = math.tanh %19 : vector<32x128xf32>
    %21 = arith.truncf %20 : vector<32x128xf32> to vector<32x128xbf16>
    %c0_15 = arith.constant 0 : index
    %c0_16 = arith.constant 0 : index
    %22 = vector.load %arg8[%c0_15, %c0_16] : memref<128x128xbf16, #tpu.memory_space<vmem>>, vector<128x128xbf16>
    %cst_17 = arith.constant dense<0.000000e+00> : vector<32x128xf32>
    %23 = tpu.matmul %21, %22, %cst_17 {dimension_numbers = #tpu.dot_dimension_numbers<[1], [0], [0], [1], [0, 0, 1, 1], [], []>} : vector<32x128xbf16>, vector<128x128xbf16>, vector<32x128xf32> -> vector<32x128xf32>
    %c0_18 = arith.constant 0 : index
    %c0_19 = arith.constant 0 : index
    %24 = vector.load %arg9[%c0_18, %c0_19] : memref<1x128xf32, #tpu.memory_space<vmem>>, vector<1x128xf32>
    %25 = vector.broadcast %24 : vector<1x128xf32> to vector<32x128xf32>
    %26 = arith.addf %23, %25 : vector<32x128xf32>
    %27 = vector.extract_strided_slice %26 {offsets = [0, 0], sizes = [32, 32], strides = [1, 1]} : vector<32x128xf32> to vector<32x32xf32>
    %c0_20 = arith.constant 0 : index
    %c0_21 = arith.constant 0 : index
    %28 = vector.load %arg10[%c0_20, %c0_21] : memref<32x32xf32, #tpu.memory_space<vmem>>, vector<32x32xf32>
    tpu.vector_store %arg10[%c0_20, %c0_21], %27 {strides = array<i32>} : memref<32x32xf32, #tpu.memory_space<vmem>>, vector<32x32xf32>,
    return
  }
  func.func @transform_0(%arg0: i32) -> (i32, i32) {
    %c0_i32 = arith.constant 0 : i32
    %c0_i32_0 = arith.constant 0 : i32
    return %arg0, %c0_i32 : i32, i32
  }
  func.func @transform_1(%arg0: i32) -> (i32, i32) {
    %c0_i32 = arith.constant 0 : i32
    %c0_i32_0 = arith.constant 0 : i32
    %c0_i32_1 = arith.constant 0 : i32
    return %c0_i32, %c0_i32_0 : i32, i32
  }
  func.func @transform_2(%arg0: i32) -> (i32, i32) {
    %c0_i32 = arith.constant 0 : i32
    %c0_i32_0 = arith.constant 0 : i32
    %c0_i32_1 = arith.constant 0 : i32
    return %c0_i32, %c0_i32_0 : i32, i32
  }
  func.func @transform_3(%arg0: i32) -> (i32, i32) {
    %c0_i32 = arith.constant 0 : i32
    %c0_i32_0 = arith.constant 0 : i32
    %c0_i32_1 = arith.constant 0 : i32
    return %c0_i32, %c0_i32_0 : i32, i32
  }
  func.func @transform_4(%arg0: i32) -> (i32, i32) {
    %c0_i32 = arith.constant 0 : i32
    %c0_i32_0 = arith.constant 0 : i32
    %c0_i32_1 = arith.constant 0 : i32
    return %c0_i32, %c0_i32_0 : i32, i32
  }
  func.func @transform_5(%arg0: i32) -> (i32, i32) {
    %c0_i32 = arith.constant 0 : i32
    %c0_i32_0 = arith.constant 0 : i32
    %c0_i32_1 = arith.constant 0 : i32
    return %c0_i32, %c0_i32_0 : i32, i32
  }
  func.func @transform_6(%arg0: i32) -> (i32, i32) {
    %c0_i32 = arith.constant 0 : i32
    %c0_i32_0 = arith.constant 0 : i32
    %c0_i32_1 = arith.constant 0 : i32
    return %c0_i32, %c0_i32_0 : i32, i32
  }
  func.func @transform_7(%arg0: i32) -> (i32, i32) {
    %c0_i32 = arith.constant 0 : i32
    %c0_i32_0 = arith.constant 0 : i32
    %c0_i32_1 = arith.constant 0 : i32
    return %c0_i32, %c0_i32_0 : i32, i32
  }
  func.func @transform_8(%arg0: i32) -> (i32, i32) {
    %c0_i32 = arith.constant 0 : i32
    %c0_i32_0 = arith.constant 0 : i32
    %c0_i32_1 = arith.constant 0 : i32
    return %c0_i32, %c0_i32_0 : i32, i32
  }
  func.func @transform_9(%arg0: i32) -> (i32, i32) {
    %c0_i32 = arith.constant 0 : i32
    %c0_i32_0 = arith.constant 0 : i32
    return %arg0, %c0_i32 : i32, i32
  }
}

</mosaic_0001>

<llo_original>
// kernel: autoencoder_apply.1
$region0: #{autoencoder_apply.1}
  #allocation0 [shape = 'u32[]', space=smem, size = 0x4, offset = 0x4, fixed_abs, tag = 'smem constant byte address 0x4 - core index']
  #allocation1 [shape = 'u32[144,128]{1,0:T(1,128)}', space=vmem, size = 0x12000, scoped, tag = 'internal scratch']
  %s0 = inlined_call_operand.vmem [shape: bf16[64,128], index: 0, kind: input, shape index: {}]
  %s1 = inlined_call_operand.vmem [shape: bf16[128,128], index: 1, kind: input, shape index: {}]
  %s2 = inlined_call_operand.vmem [shape: f32[1,128], index: 2, kind: input, shape index: {}]
  %s3 = inlined_call_operand.vmem [shape: bf16[128,128], index: 3, kind: input, shape index: {}]
  %s4 = inlined_call_operand.vmem [shape: f32[1,128], index: 4, kind: input, shape index: {}]
  %s5 = inlined_call_operand.hbm [shape: bf16[128,128], index: 5, kind: input, shape index: {}]
  %s6 = inlined_call_operand.vmem [shape: f32[1,128], index: 6, kind: input, shape index: {}]
  %s7 = inlined_call_operand.hbm [shape: bf16[128,128], index: 7, kind: input, shape index: {}]
  %s8 = inlined_call_operand.vmem [shape: f32[1,128], index: 8, kind: input, shape index: {}]
  %s9 = inlined_call_operand.vmem [shape: f32[64,32], index: 9, kind: output, shape index: {}]
  %s10 = sld [smem:[#allocation0]]
  $region77: #{autoencoder_apply.1} parent=0
    _
  %s12 = ssub.s32 1, %s10
  %s13 = scalar_select 0, %s12, %s10
  $region1: #{autoencoder_apply.1} parent=0
    #allocation2 [shape = 'u8[32768]{0}', space=vmem, size = 0x8000, scoped, tag = 'input window, operand 5, single buffered']
    #allocation3 [shape = 's32[2]{0}', space=sflag, size = 0x8, scoped, tag = 'scoped memory for autoencoder_apply.1']
    #allocation4 [shape = 'u8[32768]{0}', space=vmem, size = 0x8000, scoped, tag = 'input window, operand 7, single buffered']
    #allocation5 [shape = 's32[1]{0}', space=sflag, size = 0x4, scoped, tag = 'scoped memory for autoencoder_apply.1']
    %14 = vsyncpa [#allocation3], 0
    %15 = vsyncpa [#allocation5], 0
    loop: start=0, step=1, limit=4
    $region2: #{autoencoder_apply.1} parent=1 // loop_pre_header
      _
    $region3: #{autoencoder_apply.1} parent=1 // loop_header
      %s17 = sphi 0, %s21
      %p18 = scmp.ge.s32.totalorder %s17, 4
      %s27 = sphi 0, %s29
      %s30 = sphi 0, %s27
      %s31 = sphi 0, %s30
      %s47 = sphi 0, %s31
      %s51 = sphi 0, %s51
      %s53 = sphi 0, %s51
      %s54 = sphi 0, %s53
      %s68 = sphi 0, %s54
      %s72 = sphi 0, %s72
      %s74 = sphi 0, %s72
      %s75 = sphi 0, %s74
      %s89 = sphi 0, %s75
      %s93 = sphi 0, %s93
      %s95 = sphi 0, %s93
      %s96 = sphi 0, %s95
      %s110 = sphi 0, %s96
      %s114 = sphi 0, %s114
      %s116 = sphi 0, %s114
      %s117 = sphi 0, %s116
      %s131 = sphi 0, %s117
      %s135 = sphi 0, %s135
      %s137 = sphi 0, %s135
      %s138 = sphi 0, %s137
      %s152 = sphi 0, %s138
      %s156 = sphi 0, %s156
      %s158 = sphi 0, %s156
      %s159 = sphi 0, %s158
      %s173 = sphi 0, %s159
      %s177 = sphi 0, %s177
      %s179 = sphi 0, %s177
      %s180 = sphi 0, %s179
      %s194 = sphi 0, %s180
      %s198 = sphi 0, %s198
      %s200 = sphi 0, %s198
      %s201 = sphi 0, %s200
      %s215 = sphi 0, %s201
      %s221 = sphi 0, %s223
      %s224 = sphi 0, %s221
      %s225 = sphi 0, %s224
      %s241 = sphi 0, %s225
    $region4: #{autoencoder_apply.1} parent=1 // loop_header_branch
      %20 = sbr.rel (%p18) target = $region8
    $region5: #{autoencoder_apply.1} parent=1 // loop_body
      %s22 = ssub.s32 %s17, 1
      %s23 = ssub.s32 %s17, 2
      %s24 = sadd.s32 %s17, 1
      %s25 = ssub.s32 %s17, %s24
      %p26 = scmp.eq.s32.totalorder %s25, 0
      %s28 = sadd.s32 %s27, 1
      %s29 = scalar_select %p26, %s27, %s28
      %p32 = pneg %p26
      %p33 = scmp.eq.s32.totalorder %s17, 1
      %p34 = por %p32, %p33
      %p35 = scmp.ne.s32.totalorder %s27, %s30
      %p36 = scmp.eq.s32.totalorder %s17, 0
      %p37 = por %p35, %p36
      %p38 = scmp.ne.s32.totalorder %s27, %s30
      %p39 = scmp.eq.s32.totalorder %s22, 1
      %p40 = por %p38, %p39
      %p41 = scmp.ne.s32.totalorder %s30, %s31
      %p42 = scmp.eq.s32.totalorder %s22, 0
      %p43 = por %p41, %p42
      %p44 = scmp.ne.s32.totalorder %s30, %s31
      %p45 = scmp.eq.s32.totalorder %s23, 1
      %p46 = por %p44, %p45
      %p48 = scmp.ne.s32.totalorder %s31, %s47
      %p49 = scmp.eq.s32.totalorder %s23, 0
      %p50 = por %p48, %p49
      %s52 = sadd.s32 %s51, 1
      %p55 = scmp.eq.s32.totalorder %s17, 1
      %p56 = scmp.ne.s32.totalorder %s51, %s53
      %p57 = scmp.eq.s32.totalorder %s17, 0
      %p58 = por %p56, %p57
      %p59 = scmp.ne.s32.totalorder %s51, %s53
      %p60 = scmp.eq.s32.totalorder %s22, 1
      %p61 = por %p59, %p60
      %p62 = scmp.ne.s32.totalorder %s53, %s54
      %p63 = scmp.eq.s32.totalorder %s22, 0
      %p64 = por %p62, %p63
      %p65 = scmp.ne.s32.totalorder %s53, %s54
      %p66 = scmp.eq.s32.totalorder %s23, 1
      %p67 = por %p65, %p66
      %p69 = scmp.ne.s32.totalorder %s54, %s68
      %p70 = scmp.eq.s32.totalorder %s23, 0
      %p71 = por %p69, %p70
      %s73 = sadd.s32 %s72, 1
      %p76 = scmp.eq.s32.totalorder %s17, 1
      %p77 = scmp.ne.s32.totalorder %s72, %s74
      %p78 = scmp.eq.s32.totalorder %s17, 0
      %p79 = por %p77, %p78
      %p80 = scmp.ne.s32.totalorder %s72, %s74
      %p81 = scmp.eq.s32.totalorder %s22, 1
      %p82 = por %p80, %p81
      %p83 = scmp.ne.s32.totalorder %s74, %s75
      %p84 = scmp.eq.s32.totalorder %s22, 0
      %p85 = por %p83, %p84
      %p86 = scmp.ne.s32.totalorder %s74, %s75
      %p87 = scmp.eq.s32.totalorder %s23, 1
      %p88 = por %p86, %p87
      %p90 = scmp.ne.s32.totalorder %s75, %s89
      %p91 = scmp.eq.s32.totalorder %s23, 0
      %p92 = por %p90, %p91
      %s94 = sadd.s32 %s93, 1
      %p97 = scmp.eq.s32.totalorder %s17, 1
      %p98 = scmp.ne.s32.totalorder %s93, %s95
      %p99 = scmp.eq.s32.totalorder %s17, 0
      %p100 = por %p98, %p99
      %p101 = scmp.ne.s32.totalorder %s93, %s95
      %p102 = scmp.eq.s32.totalorder %s22, 1
      %p103 = por %p101, %p102
      %p104 = scmp.ne.s32.totalorder %s95, %s96
      %p105 = scmp.eq.s32.totalorder %s22, 0
      %p106 = por %p104, %p105
      %p107 = scmp.ne.s32.totalorder %s95, %s96
      %p108 = scmp.eq.s32.totalorder %s23, 1
      %p109 = por %p107, %p108
      %p111 = scmp.ne.s32.totalorder %s96, %s110
      %p112 = scmp.eq.s32.totalorder %s23, 0
      %p113 = por %p111, %p112
      %s115 = sadd.s32 %s114, 1
      %p118 = scmp.eq.s32.totalorder %s17, 1
      %p119 = scmp.ne.s32.totalorder %s114, %s116
      %p120 = scmp.eq.s32.totalorder %s17, 0
      %p121 = por %p119, %p120
      %p122 = scmp.ne.s32.totalorder %s114, %s116
      %p123 = scmp.eq.s32.totalorder %s22, 1
      %p124 = por %p122, %p123
      %p125 = scmp.ne.s32.totalorder %s116, %s117
      %p126 = scmp.eq.s32.totalorder %s22, 0
      %p127 = por %p125, %p126
      %p128 = scmp.ne.s32.totalorder %s116, %s117
      %p129 = scmp.eq.s32.totalorder %s23, 1
      %p130 = por %p128, %p129
      %p132 = scmp.ne.s32.totalorder %s117, %s131
      %p133 = scmp.eq.s32.totalorder %s23, 0
      %p134 = por %p132, %p133
      %s136 = sadd.s32 %s135, 1
      %p139 = scmp.eq.s32.totalorder %s17, 1
      %p140 = scmp.ne.s32.totalorder %s135, %s137
      %p141 = scmp.eq.s32.totalorder %s17, 0
      %p142 = por %p140, %p141
      %p143 = scmp.ne.s32.totalorder %s135, %s137
      %p144 = scmp.eq.s32.totalorder %s22, 1
      %p145 = por %p143, %p144
      %p146 = scmp.ne.s32.totalorder %s137, %s138
      %p147 = scmp.eq.s32.totalorder %s22, 0
      %p148 = por %p146, %p147
      %p149 = scmp.ne.s32.totalorder %s137, %s138
      %p150 = scmp.eq.s32.totalorder %s23, 1
      %p151 = por %p149, %p150
      %p153 = scmp.ne.s32.totalorder %s138, %s152
      %p154 = scmp.eq.s32.totalorder %s23, 0
      %p155 = por %p153, %p154
      %s157 = sadd.s32 %s156, 1
      %p160 = scmp.eq.s32.totalorder %s17, 1
      %p161 = scmp.ne.s32.totalorder %s156, %s158
      %p162 = scmp.eq.s32.totalorder %s17, 0
      %p163 = por %p161, %p162
      %p164 = scmp.ne.s32.totalorder %s156, %s158
      %p165 = scmp.eq.s32.totalorder %s22, 1
      %p166 = por %p164, %p165
      %p167 = scmp.ne.s32.totalorder %s158, %s159
      %p168 = scmp.eq.s32.totalorder %s22, 0
      %p169 = por %p167, %p168
      %p170 = scmp.ne.s32.totalorder %s158, %s159
      %p171 = scmp.eq.s32.totalorder %s23, 1
      %p172 = por %p170, %p171
      %p174 = scmp.ne.s32.totalorder %s159, %s173
      %p175 = scmp.eq.s32.totalorder %s23, 0
      %p176 = por %p174, %p175
      %s178 = sadd.s32 %s177, 1
      %p181 = scmp.eq.s32.totalorder %s17, 1
      %p182 = scmp.ne.s32.totalorder %s177, %s179
      %p183 = scmp.eq.s32.totalorder %s17, 0
      %p184 = por %p182, %p183
      %p185 = scmp.ne.s32.totalorder %s177, %s179
      %p186 = scmp.eq.s32.totalorder %s22, 1
      %p187 = por %p185, %p186
      %p188 = scmp.ne.s32.totalorder %s179, %s180
      %p189 = scmp.eq.s32.totalorder %s22, 0
      %p190 = por %p188, %p189
      %p191 = scmp.ne.s32.totalorder %s179, %s180
      %p192 = scmp.eq.s32.totalorder %s23, 1
      %p193 = por %p191, %p192
      %p195 = scmp.ne.s32.totalorder %s180, %s194
      %p196 = scmp.eq.s32.totalorder %s23, 0
      %p197 = por %p195, %p196
      %s199 = sadd.s32 %s198, 1
      %p202 = scmp.eq.s32.totalorder %s17, 1
      %p203 = scmp.ne.s32.totalorder %s198, %s200
      %p204 = scmp.eq.s32.totalorder %s17, 0
      %p205 = por %p203, %p204
      %p206 = scmp.ne.s32.totalorder %s198, %s200
      %p207 = scmp.eq.s32.totalorder %s22, 1
      %p208 = por %p206, %p207
      %p209 = scmp.ne.s32.totalorder %s200, %s201
      %p210 = scmp.eq.s32.totalorder %s22, 0
      %p211 = por %p209, %p210
      %p212 = scmp.ne.s32.totalorder %s200, %s201
      %p213 = scmp.eq.s32.totalorder %s23, 1
      %p214 = por %p212, %p213
      %p216 = scmp.ne.s32.totalorder %s201, %s215
      %p217 = scmp.eq.s32.totalorder %s23, 0
      %p218 = por %p216, %p217
      %s219 = ssub.s32 %s17, %s24
      %p220 = scmp.eq.s32.totalorder %s219, 0
      %s222 = sadd.s32 %s221, 1
      %s223 = scalar_select %p220, %s221, %s222
      %p226 = pneg %p220
      %p227 = scmp.eq.s32.totalorder %s17, 1
      %p228 = por %p226, %p227
      %p229 = scmp.ne.s32.totalorder %s221, %s224
      %p230 = scmp.eq.s32.totalorder %s17, 0
      %p231 = por %p229, %p230
      %p232 = scmp.ne.s32.totalorder %s221, %s224
      %p233 = scmp.eq.s32.totalorder %s22, 1
      %p234 = por %p232, %p233
      %p235 = scmp.ne.s32.totalorder %s224, %s225
      %p236 = scmp.eq.s32.totalorder %s22, 0
      %p237 = por %p235, %p236
      %p238 = scmp.ne.s32.totalorder %s224, %s225
      %p239 = scmp.eq.s32.totalorder %s23, 1
      %p240 = por %p238, %p239
      %p242 = scmp.ne.s32.totalorder %s225, %s241
      %p243 = scmp.eq.s32.totalorder %s23, 0
      %p244 = por %p242, %p243
      %p245 = scmp.le.s32.totalorder 1, %s17
      %p246 = scmp.lt.s32.totalorder %s17, 3
      %p247 = pnand %p245, %p246
      %p248 = pneg %p247
      // Predicated region
      $region9: #{autoencoder_apply.1} parent=5 // pred_check
        _
      $region10: #{autoencoder_apply.1} parent=5 // pred_check_branch
        %250 = sbr.rel (%p247) target = $region12
      $region11: #{autoencoder_apply.1} parent=5 // pred_region
        %s251 = ssub.s32 %s17, 1
        // Predicated region
        $region13: #{autoencoder_apply.1} parent=11 // pred_check
          %p252 = pneg %p64
        $region14: #{autoencoder_apply.1} parent=11 // pred_check_branch
          %254 = sbr.rel (%p252) target = $region16
        $region15: #{autoencoder_apply.1} parent=11 // pred_region
          _
        $region16: #{autoencoder_apply.1} parent=11 // pred_fallthru
          _
        // Predicated region
        $region17: #{autoencoder_apply.1} parent=11 // pred_check
          %p255 = pneg %p85
        $region18: #{autoencoder_apply.1} parent=11 // pred_check_branch
          %257 = sbr.rel (%p255) target = $region20
        $region19: #{autoencoder_apply.1} parent=11 // pred_region
          _
        $region20: #{autoencoder_apply.1} parent=11 // pred_fallthru
          _
        // Predicated region
        $region21: #{autoencoder_apply.1} parent=11 // pred_check
          %p258 = pneg %p106
        $region22: #{autoencoder_apply.1} parent=11 // pred_check_branch
          %260 = sbr.rel (%p258) target = $region24
        $region23: #{autoencoder_apply.1} parent=11 // pred_region
          _
        $region24: #{autoencoder_apply.1} parent=11 // pred_fallthru
          _
        // Predicated region
        $region25: #{autoencoder_apply.1} parent=11 // pred_check
          %p261 = pneg %p127
        $region26: #{autoencoder_apply.1} parent=11 // pred_check_branch
          %263 = sbr.rel (%p261) target = $region28
        $region27: #{autoencoder_apply.1} parent=11 // pred_region
          _
        $region28: #{autoencoder_apply.1} parent=11 // pred_fallthru
          _
        // Predicated region
        $region29: #{autoencoder_apply.1} parent=11 // pred_check
          %p264 = pneg %p148
        $region30: #{autoencoder_apply.1} parent=11 // pred_check_branch
          %266 = sbr.rel (%p264) target = $region32
        $region31: #{autoencoder_apply.1} parent=11 // pred_region
          %s268 = ssub.s32 1024, 1024
          %269 = vsyncadd [#allocation3], %s268
          %s270 = sshll.u32 [#allocation2], 4
          %s271 = int_to_ptr.vmem [resolvable:$true] %s270
          %276 = dma.hbm_to_vmem [thread:$0]  %s5, 1024, %s271, [#allocation3], 64, 64, 4
        $region32: #{autoencoder_apply.1} parent=11 // pred_fallthru
          _
        // Predicated region
        $region33: #{autoencoder_apply.1} parent=11 // pred_check
          %p277 = pneg %p169
        $region34: #{autoencoder_apply.1} parent=11 // pred_check_branch
          %279 = sbr.rel (%p277) target = $region36
        $region35: #{autoencoder_apply.1} parent=11 // pred_region
          _
        $region36: #{autoencoder_apply.1} parent=11 // pred_fallthru
          _
        // Predicated region
        $region37: #{autoencoder_apply.1} parent=11 // pred_check
          %p280 = pneg %p190
        $region38: #{autoencoder_apply.1} parent=11 // pred_check_branch
          %282 = sbr.rel (%p280) target = $region40
        $region39: #{autoencoder_apply.1} parent=11 // pred_region
          %s284 = ssub.s32 1024, 1024
          %285 = vsyncadd [#allocation5], %s284
          %s286 = sshll.u32 [#allocation4], 4
          %s287 = int_to_ptr.vmem [resolvable:$true] %s286
          %292 = dma.hbm_to_vmem [thread:$0]  %s7, 1024, %s287, [#allocation5], 64, 64, 4
        $region40: #{autoencoder_apply.1} parent=11 // pred_fallthru
          _
        // Predicated region
        $region41: #{autoencoder_apply.1} parent=11 // pred_check
          %p293 = pneg %p211
        $region42: #{autoencoder_apply.1} parent=11 // pred_check_branch
          %295 = sbr.rel (%p293) target = $region44
        $region43: #{autoencoder_apply.1} parent=11 // pred_region
          _
        $region44: #{autoencoder_apply.1} parent=11 // pred_fallthru
          _
      $region12: #{autoencoder_apply.1} parent=5 // pred_fallthru
        _
      %p296 = scmp.lt.s32.totalorder %s17, 2
      // Predicated region
      $region45: #{autoencoder_apply.1} parent=5 // pred_check
        %p297 = pneg %p296
      $region46: #{autoencoder_apply.1} parent=5 // pred_check_branch
        %299 = sbr.rel (%p297) target = $region48
      $region47: #{autoencoder_apply.1} parent=5 // pred_region
        // Predicated region
        $region49: #{autoencoder_apply.1} parent=47 // pred_check
          %p300 = pneg %p37
        $region50: #{autoencoder_apply.1} parent=47 // pred_check_branch
          %302 = sbr.rel (%p300) target = $region52
        $region51: #{autoencoder_apply.1} parent=47 // pred_region
          %s303 = smul.u32 4, %s17
          %p304 = scmp.lt.s32.totalorder %s303, 7
          %s305 = scalar_select %p304, %s303, 7
          %s306 = smul.addr %s305, 4
          %s307 = scalar_lea.vmem %s0, %s306
          %s308 = smul.u32 4, %s17
        $region52: #{autoencoder_apply.1} parent=47 // pred_fallthru
          _
      $region48: #{autoencoder_apply.1} parent=5 // pred_fallthru
        _
      %p309 = scmp.le.s32.totalorder 1, %s17
      %p310 = scmp.lt.s32.totalorder %s17, 3
      %p311 = pnand %p309, %p310
      %p312 = pneg %p311
      // Predicated region
      $region53: #{autoencoder_apply.1} parent=5 // pred_check
        _
      $region54: #{autoencoder_apply.1} parent=5 // pred_check_branch
        %314 = sbr.rel (%p311) target = $region56
      $region55: #{autoencoder_apply.1} parent=5 // pred_region
        %s315 = ssub.s32 %s17, 1
        // Predicated region
        $region57: #{autoencoder_apply.1} parent=55 // pred_check
          %p316 = pneg %p148
        $region58: #{autoencoder_apply.1} parent=55 // pred_check_branch
          %318 = sbr.rel (%p316) target = $region60
        $region59: #{autoencoder_apply.1} parent=55 // pred_region
          %319 = dma.done [#allocation3], 1024
        $region60: #{autoencoder_apply.1} parent=55 // pred_fallthru
          _
        // Predicated region
        $region61: #{autoencoder_apply.1} parent=55 // pred_check
          %p320 = pneg %p190
        $region62: #{autoencoder_apply.1} parent=55 // pred_check_branch
          %322 = sbr.rel (%p320) target = $region64
        $region63: #{autoencoder_apply.1} parent=55 // pred_region
          %323 = dma.done [#allocation5], 1024
        $region64: #{autoencoder_apply.1} parent=55 // pred_fallthru
          _
        %s324 = smul.u32 4, %s22
        %p325 = scmp.lt.s32.totalorder %s324, 7
        %s326 = scalar_select %p325, %s324, 7
        %s327 = smul.addr %s326, 4
        %s328 = scalar_lea.vmem %s0, %s327
        %p329 = pneg %p43
        %p330 = pneg %p40
        %p331 = pneg %p64
        %p332 = pneg %p61
        %p333 = pneg %p85
        %p334 = pneg %p82
        %p335 = pneg %p106
        %p336 = pneg %p103
        %p337 = pneg %p127
        %p338 = pneg %p124
        %p339 = pneg %p148
        %p340 = pneg %p145
        %p341 = pneg %p169
        %p342 = pneg %p166
        %p343 = pneg %p190
        %p344 = pneg %p187
        %p345 = pneg %p211
        %p346 = pneg %p208
        %p347 = pneg %p237
        %p348 = pneg %p234
        %s349 = smul.u32 4, %s22
        %p350 = scmp.lt.s32.totalorder %s349, 7
        %s351 = scalar_select %p350, %s349, 7
        %s352 = smul.addr %s351, 8
        %s353 = scalar_lea.vmem %s9, %s352
        %s354 = smul.u32 4, %s22
        %p355 = scmp.lt.s32.totalorder %s354, 7
        %s356 = scalar_select %p355, %s354, 7
        %s357 = smul.addr %s356, 4
        %s358 = scalar_lea.vmem %s0, %s357
        %s359 = smul.u32 4, %s22
        %s360 = smul.u32 4, %s22
        %p361 = scmp.lt.s32.totalorder %s360, 7
        %s362 = scalar_select %p361, %s360, 7
        %s363 = smul.addr %s362, 8
        %s364 = scalar_lea.vmem %s9, %s363
        %s365 = smul.u32 4, %s22
        %v367 = vld [vmem:[%s358] sm:$0xf]
        %v368 = vld [vmem:[%s358 + $0x4] sm:$0xf]
        %v369 = vld [vmem:[%s358 + $0x8] sm:$0xf]
        %v370 = vld [vmem:[%s358 + $0xc] sm:$0xf]
        %v371 = vld [vmem:[%s1] sm:$0xf]
        %v372 = vld [vmem:[%s1 + $0x4] sm:$0xf]
        %v373 = vld [vmem:[%s1 + $0x8] sm:$0xf]
        %v374 = vld [vmem:[%s1 + $0xc] sm:$0xf]
        %v375 = vld [vmem:[%s1 + $0x10] sm:$0xf]
        %v376 = vld [vmem:[%s1 + $0x14] sm:$0xf]
        %v377 = vld [vmem:[%s1 + $0x18] sm:$0xf]
        %v378 = vld [vmem:[%s1 + $0x1c] sm:$0xf]
        %v379 = vld [vmem:[%s1 + $0x20] sm:$0xf]
        %v380 = vld [vmem:[%s1 + $0x24] sm:$0xf]
        %v381 = vld [vmem:[%s1 + $0x28] sm:$0xf]
        %v382 = vld [vmem:[%s1 + $0x2c] sm:$0xf]
        %v383 = vld [vmem:[%s1 + $0x30] sm:$0xf]
        %v384 = vld [vmem:[%s1 + $0x34] sm:$0xf]
        %v385 = vld [vmem:[%s1 + $0x38] sm:$0xf]
        %v386 = vld [vmem:[%s1 + $0x3c] sm:$0xf]
        %v387 = vld [vmem:[%s2] sm:$0x1]
        %v389 = vlaneseq
        %v390 = vshrl.u32 %v389, 7
        %v391 = vsub.s32 0, %v390
        %v392 = vrot.slane %v387, %v391
        %v398 = vunpack.c.l.b16 %v367
        %v399 = vunpack.c.l.b16 %v368
        %v400 = vunpack.c.l.b16 %v369
        %v401 = vunpack.c.l.b16 %v370
        %v402 = vpack.c.b16 %v399, %v398
        %v403 = vpack.c.b16 %v401, %v400
        %v422 = vunpack.c.l.b16 %v371
        %v423 = vunpack.c.l.b16 %v372
        %v424 = vunpack.c.l.b16 %v373
        %v425 = vunpack.c.l.b16 %v374
        %v426 = vunpack.c.l.b16 %v375
        %v427 = vunpack.c.l.b16 %v376
        %v428 = vunpack.c.l.b16 %v377
        %v429 = vunpack.c.l.b16 %v378
        %v430 = vunpack.c.l.b16 %v379
        %v431 = vunpack.c.l.b16 %v380
        %v432 = vunpack.c.l.b16 %v381
        %v433 = vunpack.c.l.b16 %v382
        %v434 = vunpack.c.l.b16 %v383
        %v435 = vunpack.c.l.b16 %v384
        %v436 = vunpack.c.l.b16 %v385
        %v437 = vunpack.c.l.b16 %v386
        %v438 = vpack.c.b16 %v423, %v422
        %v439 = vpack.c.b16 %v425, %v424
        %v440 = vpack.c.b16 %v427, %v426
        %v441 = vpack.c.b16 %v429, %v428
        %v442 = vpack.c.b16 %v431, %v430
        %v443 = vpack.c.b16 %v433, %v432
        %v444 = vpack.c.b16 %v435, %v434
        %v445 = vpack.c.b16 %v437, %v436
        %454 = vmatprep.subr.bf16.mxu0 0
        %455 = vmatpush1.bf16.msra.mxu0 %v438
        %456 = vmatprep.subr.bf16.mxu0 0
        %457 = vmatpush1.bf16.msra.mxu0 %v439
        %458 = vmatprep.subr.bf16.mxu0 0
        %459 = vmatpush1.bf16.msra.mxu0 %v440
        %460 = vmatprep.subr.bf16.mxu0 0
        %461 = vmatpush1.bf16.msra.mxu0 %v441
        %462 = vmatprep.subr.bf16.mxu0 0
        %463 = vmatpush1.bf16.msra.mxu0 %v442
        %464 = vmatprep.subr.bf16.mxu0 0
        %465 = vmatpush1.bf16.msra.mxu0 %v443
        %466 = vmatprep.subr.bf16.mxu0 0
        %467 = vmatpush1.bf16.msra.mxu0 %v444
        %468 = vmatprep.subr.bf16.mxu0 0
        %469 = vmatpush1.bf16.msra.mxu0 %v445
        %470 = vmatprep.subr.bf16.mxu0 0
        %471 = vmatpush1.bf16.msra.mxu0 0
        %472 = vmatprep.subr.bf16.mxu0 0
        %473 = vmatpush1.bf16.msra.mxu0 0
        %474 = vmatprep.subr.bf16.mxu0 0
        %475 = vmatpush1.bf16.msra.mxu0 0
        %476 = vmatprep.subr.bf16.mxu0 0
        %477 = vmatpush1.bf16.msra.mxu0 0
        %478 = vmatprep.subr.bf16.mxu0 0
        %479 = vmatpush1.bf16.msra.mxu0 0
        %480 = vmatprep.subr.bf16.mxu0 0
        %481 = vmatpush1.bf16.msra.mxu0 0
        %482 = vmatprep.subr.bf16.mxu0 0
        %483 = vmatpush1.bf16.msra.mxu0 0
        %484 = vmatprep.subr.bf16.mxu0 0
        %485 = vmatpush1.bf16.msra.mxu0 0
        %486 = vmatprep.mubr.bf16.mxu0 0
        %487 = vmatmul.mubr.bf16.gmra.mrb[0].mxu0 %v402
        %v488 = vpop.f32.mrb[0].mxu0
        %v489 = vadd.f32 %v392, %v488
        %v490 = vpop.f32.mrb[0].mxu0
        %v491 = vpop.f32.mrb[0].mxu0
        %v492 = vadd.f32 %v392, %v491
        %v493 = vpop.f32.mrb[0].mxu0
        %494 = vmatprep.mubr.bf16.mxu0 0
        %495 = vmatmul.mubr.bf16.gmra.mrb[0].mxu0 %v403
        %v496 = vpop.f32.mrb[0].mxu0
        %v497 = vadd.f32 %v392, %v496
        %v498 = vpop.f32.mrb[0].mxu0
        %v499 = vpop.f32.mrb[0].mxu0
        %v500 = vadd.f32 %v392, %v499
        %v501 = vpop.f32.mrb[0].mxu0
        %502 = vdwg.mxu0
        %v503 = vtanh.pop %v489
        %v504 = vtanh.pop %v492
        %v505 = vtanh.pop %v497
        %v506 = vtanh.pop %v500
        %v507 = vpack.c.bf16 %v504, %v503
        %v508 = vpack.c.bf16 %v506, %v505
        %v509 = vld [vmem:[%s3] sm:$0xf]
        %v510 = vld [vmem:[%s3 + $0x4] sm:$0xf]
        %v511 = vld [vmem:[%s3 + $0x8] sm:$0xf]
        %v512 = vld [vmem:[%s3 + $0xc] sm:$0xf]
        %v513 = vld [vmem:[%s3 + $0x10] sm:$0xf]
        %v514 = vld [vmem:[%s3 + $0x14] sm:$0xf]
        %v515 = vld [vmem:[%s3 + $0x18] sm:$0xf]
        %v516 = vld [vmem:[%s3 + $0x1c] sm:$0xf]
        %v517 = vld [vmem:[%s3 + $0x20] sm:$0xf]
        %v518 = vld [vmem:[%s3 + $0x24] sm:$0xf]
        %v519 = vld [vmem:[%s3 + $0x28] sm:$0xf]
        %v520 = vld [vmem:[%s3 + $0x2c] sm:$0xf]
        %v521 = vld [vmem:[%s3 + $0x30] sm:$0xf]
        %v522 = vld [vmem:[%s3 + $0x34] sm:$0xf]
        %v523 = vld [vmem:[%s3 + $0x38] sm:$0xf]
        %v524 = vld [vmem:[%s3 + $0x3c] sm:$0xf]
        %v525 = vld [vmem:[%s4] sm:$0x1]
        %v527 = vlaneseq
        %v528 = vshrl.u32 %v527, 7
        %v529 = vsub.s32 0, %v528
        %v530 = vrot.slane %v525, %v529
        %v548 = vunpack.c.l.b16 %v509
        %v549 = vunpack.c.l.b16 %v510
        %v550 = vunpack.c.l.b16 %v511
        %v551 = vunpack.c.l.b16 %v512
        %v552 = vunpack.c.l.b16 %v513
        %v553 = vunpack.c.l.b16 %v514
        %v554 = vunpack.c.l.b16 %v515
        %v555 = vunpack.c.l.b16 %v516
        %v556 = vunpack.c.l.b16 %v517
        %v557 = vunpack.c.l.b16 %v518
        %v558 = vunpack.c.l.b16 %v519
        %v559 = vunpack.c.l.b16 %v520
        %v560 = vunpack.c.l.b16 %v521
        %v561 = vunpack.c.l.b16 %v522
        %v562 = vunpack.c.l.b16 %v523
        %v563 = vunpack.c.l.b16 %v524
        %v564 = vpack.c.b16 %v549, %v548
        %v565 = vpack.c.b16 %v551, %v550
        %v566 = vpack.c.b16 %v553, %v552
        %v567 = vpack.c.b16 %v555, %v554
        %v568 = vpack.c.b16 %v557, %v556
        %v569 = vpack.c.b16 %v559, %v558
        %v570 = vpack.c.b16 %v561, %v560
        %v571 = vpack.c.b16 %v563, %v562
        %580 = vmatprep.subr.bf16.mxu0 0
        %581 = vmatpush1.bf16.msra.mxu0 %v564
        %582 = vmatprep.subr.bf16.mxu0 0
        %583 = vmatpush1.bf16.msra.mxu0 %v565
        %584 = vmatprep.subr.bf16.mxu0 0
        %585 = vmatpush1.bf16.msra.mxu0 %v566
        %586 = vmatprep.subr.bf16.mxu0 0
        %587 = vmatpush1.bf16.msra.mxu0 %v567
        %588 = vmatprep.subr.bf16.mxu0 0
        %589 = vmatpush1.bf16.msra.mxu0 %v568
        %590 = vmatprep.subr.bf16.mxu0 0
        %591 = vmatpush1.bf16.msra.mxu0 %v569
        %592 = vmatprep.subr.bf16.mxu0 0
        %593 = vmatpush1.bf16.msra.mxu0 %v570
        %594 = vmatprep.subr.bf16.mxu0 0
        %595 = vmatpush1.bf16.msra.mxu0 %v571
        %596 = vmatprep.subr.bf16.mxu0 0
        %597 = vmatpush1.bf16.msra.mxu0 0
        %598 = vmatprep.subr.bf16.mxu0 0
        %599 = vmatpush1.bf16.msra.mxu0 0
        %600 = vmatprep.subr.bf16.mxu0 0
        %601 = vmatpush1.bf16.msra.mxu0 0
        %602 = vmatprep.subr.bf16.mxu0 0
        %603 = vmatpush1.bf16.msra.mxu0 0
        %604 = vmatprep.subr.bf16.mxu0 0
        %605 = vmatpush1.bf16.msra.mxu0 0
        %606 = vmatprep.subr.bf16.mxu0 0
        %607 = vmatpush1.bf16.msra.mxu0 0
        %608 = vmatprep.subr.bf16.mxu0 0
        %609 = vmatpush1.bf16.msra.mxu0 0
        %610 = vmatprep.subr.bf16.mxu0 0
        %611 = vmatpush1.bf16.msra.mxu0 0
        %612 = vmatprep.mubr.bf16.mxu0 0
        %613 = vmatmul.mubr.bf16.gmra.mrb[0].mxu0 %v507
        %v614 = vpop.f32.mrb[0].mxu0
        %v615 = vadd.f32 %v530, %v614
        %v616 = vpop.f32.mrb[0].mxu0
        %v617 = vpop.f32.mrb[0].mxu0
        %v618 = vadd.f32 %v530, %v617
        %v619 = vpop.f32.mrb[0].mxu0
        %620 = vmatprep.mubr.bf16.mxu0 0
        %621 = vmatmul.mubr.bf16.gmra.mrb[0].mxu0 %v508
        %v622 = vpop.f32.mrb[0].mxu0
        %v623 = vadd.f32 %v530, %v622
        %v624 = vpop.f32.mrb[0].mxu0
        %v625 = vpop.f32.mrb[0].mxu0
        %v626 = vadd.f32 %v530, %v625
        %v627 = vpop.f32.mrb[0].mxu0
        %628 = vdwg.mxu0
        %v629 = vtanh.pop %v615
        %v630 = vtanh.pop %v618
        %v631 = vtanh.pop %v623
        %v632 = vtanh.pop %v626
        %v633 = vpack.c.bf16 %v630, %v629
        %v634 = vpack.c.bf16 %v632, %v631
        %v635 = vld [vmem:[#allocation2] sm:$0xf]
        %v636 = vld [vmem:[#allocation2 + $0x4] sm:$0xf]
        %v637 = vld [vmem:[#allocation2 + $0x8] sm:$0xf]
        %v638 = vld [vmem:[#allocation2 + $0xc] sm:$0xf]
        %v639 = vld [vmem:[#allocation2 + $0x10] sm:$0xf]
        %v640 = vld [vmem:[#allocation2 + $0x14] sm:$0xf]
        %v641 = vld [vmem:[#allocation2 + $0x18] sm:$0xf]
        %v642 = vld [vmem:[#allocation2 + $0x1c] sm:$0xf]
        %v643 = vld [vmem:[#allocation2 + $0x20] sm:$0xf]
        %v644 = vld [vmem:[#allocation2 + $0x24] sm:$0xf]
        %v645 = vld [vmem:[#allocation2 + $0x28] sm:$0xf]
        %v646 = vld [vmem:[#allocation2 + $0x2c] sm:$0xf]
        %v647 = vld [vmem:[#allocation2 + $0x30] sm:$0xf]
        %v648 = vld [vmem:[#allocation2 + $0x34] sm:$0xf]
        %v649 = vld [vmem:[#allocation2 + $0x38] sm:$0xf]
        %v650 = vld [vmem:[#allocation2 + $0x3c] sm:$0xf]
        %v651 = vld [vmem:[%s6] sm:$0x1]
        %v653 = vlaneseq
        %v654 = vshrl.u32 %v653, 7
        %v655 = vsub.s32 0, %v654
        %v656 = vrot.slane %v651, %v655
        %v674 = vunpack.c.l.b16 %v635
        %v675 = vunpack.c.l.b16 %v636
        %v676 = vunpack.c.l.b16 %v637
        %v677 = vunpack.c.l.b16 %v638
        %v678 = vunpack.c.l.b16 %v639
        %v679 = vunpack.c.l.b16 %v640
        %v680 = vunpack.c.l.b16 %v641
        %v681 = vunpack.c.l.b16 %v642
        %v682 = vunpack.c.l.b16 %v643
        %v683 = vunpack.c.l.b16 %v644
        %v684 = vunpack.c.l.b16 %v645
        %v685 = vunpack.c.l.b16 %v646
        %v686 = vunpack.c.l.b16 %v647
        %v687 = vunpack.c.l.b16 %v648
        %v688 = vunpack.c.l.b16 %v649
        %v689 = vunpack.c.l.b16 %v650
        %v690 = vpack.c.b16 %v675, %v674
        %v691 = vpack.c.b16 %v677, %v676
        %v692 = vpack.c.b16 %v679, %v678
        %v693 = vpack.c.b16 %v681, %v680
        %v694 = vpack.c.b16 %v683, %v682
        %v695 = vpack.c.b16 %v685, %v684
        %v696 = vpack.c.b16 %v687, %v686
        %v697 = vpack.c.b16 %v689, %v688
        %706 = vmatprep.subr.bf16.mxu0 0
        %707 = vmatpush1.bf16.msra.mxu0 %v690
        %708 = vmatprep.subr.bf16.mxu0 0
        %709 = vmatpush1.bf16.msra.mxu0 %v691
        %710 = vmatprep.subr.bf16.mxu0 0
        %711 = vmatpush1.bf16.msra.mxu0 %v692
        %712 = vmatprep.subr.bf16.mxu0 0
        %713 = vmatpush1.bf16.msra.mxu0 %v693
        %714 = vmatprep.subr.bf16.mxu0 0
        %715 = vmatpush1.bf16.msra.mxu0 %v694
        %716 = vmatprep.subr.bf16.mxu0 0
        %717 = vmatpush1.bf16.msra.mxu0 %v695
        %718 = vmatprep.subr.bf16.mxu0 0
        %719 = vmatpush1.bf16.msra.mxu0 %v696
        %720 = vmatprep.subr.bf16.mxu0 0
        %721 = vmatpush1.bf16.msra.mxu0 %v697
        %722 = vmatprep.subr.bf16.mxu0 0
        %723 = vmatpush1.bf16.msra.mxu0 0
        %724 = vmatprep.subr.bf16.mxu0 0
        %725 = vmatpush1.bf16.msra.mxu0 0
        %726 = vmatprep.subr.bf16.mxu0 0
        %727 = vmatpush1.bf16.msra.mxu0 0
        %728 = vmatprep.subr.bf16.mxu0 0
        %729 = vmatpush1.bf16.msra.mxu0 0
        %730 = vmatprep.subr.bf16.mxu0 0
        %731 = vmatpush1.bf16.msra.mxu0 0
        %732 = vmatprep.subr.bf16.mxu0 0
        %733 = vmatpush1.bf16.msra.mxu0 0
        %734 = vmatprep.subr.bf16.mxu0 0
        %735 = vmatpush1.bf16.msra.mxu0 0
        %736 = vmatprep.subr.bf16.mxu0 0
        %737 = vmatpush1.bf16.msra.mxu0 0
        %738 = vmatprep.mubr.bf16.mxu0 0
        %739 = vmatmul.mubr.bf16.gmra.mrb[0].mxu0 %v633
        %v740 = vpop.f32.mrb[0].mxu0
        %v741 = vadd.f32 %v656, %v740
        %v742 = vpop.f32.mrb[0].mxu0
        %v743 = vpop.f32.mrb[0].mxu0
        %v744 = vadd.f32 %v656, %v743
        %v745 = vpop.f32.mrb[0].mxu0
        %746 = vmatprep.mubr.bf16.mxu0 0
        %747 = vmatmul.mubr.bf16.gmra.mrb[0].mxu0 %v634
        %v748 = vpop.f32.mrb[0].mxu0
        %v749 = vadd.f32 %v656, %v748
        %v750 = vpop.f32.mrb[0].mxu0
        %v751 = vpop.f32.mrb[0].mxu0
        %v752 = vadd.f32 %v656, %v751
        %v753 = vpop.f32.mrb[0].mxu0
        %754 = vdwg.mxu0
        %v755 = vtanh.pop %v741
        %v756 = vtanh.pop %v744
        %v757 = vtanh.pop %v749
        %v758 = vtanh.pop %v752
        %v759 = vpack.c.bf16 %v756, %v755
        %v760 = vpack.c.bf16 %v758, %v757
        %v761 = vld [vmem:[#allocation4] sm:$0xf]
        %v762 = vld [vmem:[#allocation4 + $0x4] sm:$0xf]
        %v763 = vld [vmem:[#allocation4 + $0x8] sm:$0xf]
        %v764 = vld [vmem:[#allocation4 + $0xc] sm:$0xf]
        %v765 = vld [vmem:[#allocation4 + $0x10] sm:$0xf]
        %v766 = vld [vmem:[#allocation4 + $0x14] sm:$0xf]
        %v767 = vld [vmem:[#allocation4 + $0x18] sm:$0xf]
        %v768 = vld [vmem:[#allocation4 + $0x1c] sm:$0xf]
        %v769 = vld [vmem:[#allocation4 + $0x20] sm:$0xf]
        %v770 = vld [vmem:[#allocation4 + $0x24] sm:$0xf]
        %v771 = vld [vmem:[#allocation4 + $0x28] sm:$0xf]
        %v772 = vld [vmem:[#allocation4 + $0x2c] sm:$0xf]
        %v773 = vld [vmem:[#allocation4 + $0x30] sm:$0xf]
        %v774 = vld [vmem:[#allocation4 + $0x34] sm:$0xf]
        %v775 = vld [vmem:[#allocation4 + $0x38] sm:$0xf]
        %v776 = vld [vmem:[#allocation4 + $0x3c] sm:$0xf]
        %v777 = vld [vmem:[%s8] sm:$0x1]
        %v779 = vlaneseq
        %v780 = vshrl.u32 %v779, 7
        %v781 = vsub.s32 0, %v780
        %v782 = vrot.slane %v777, %v781
        %v800 = vunpack.c.l.b16 %v761
        %v801 = vunpack.c.l.b16 %v762
        %v802 = vunpack.c.l.b16 %v763
        %v803 = vunpack.c.l.b16 %v764
        %v804 = vunpack.c.l.b16 %v765
        %v805 = vunpack.c.l.b16 %v766
        %v806 = vunpack.c.l.b16 %v767
        %v807 = vunpack.c.l.b16 %v768
        %v808 = vunpack.c.l.b16 %v769
        %v809 = vunpack.c.l.b16 %v770
        %v810 = vunpack.c.l.b16 %v771
        %v811 = vunpack.c.l.b16 %v772
        %v812 = vunpack.c.l.b16 %v773
        %v813 = vunpack.c.l.b16 %v774
        %v814 = vunpack.c.l.b16 %v775
        %v815 = vunpack.c.l.b16 %v776
        %v816 = vpack.c.b16 %v801, %v800
        %v817 = vpack.c.b16 %v803, %v802
        %v818 = vpack.c.b16 %v805, %v804
        %v819 = vpack.c.b16 %v807, %v806
        %v820 = vpack.c.b16 %v809, %v808
        %v821 = vpack.c.b16 %v811, %v810
        %v822 = vpack.c.b16 %v813, %v812
        %v823 = vpack.c.b16 %v815, %v814
        %832 = vmatprep.subr.bf16.mxu0 0
        %833 = vmatpush1.bf16.msra.mxu0 %v816
        %834 = vmatprep.subr.bf16.mxu0 0
        %835 = vmatpush1.bf16.msra.mxu0 %v817
        %836 = vmatprep.subr.bf16.mxu0 0
        %837 = vmatpush1.bf16.msra.mxu0 %v818
        %838 = vmatprep.subr.bf16.mxu0 0
        %839 = vmatpush1.bf16.msra.mxu0 %v819
        %840 = vmatprep.subr.bf16.mxu0 0
        %841 = vmatpush1.bf16.msra.mxu0 %v820
        %842 = vmatprep.subr.bf16.mxu0 0
        %843 = vmatpush1.bf16.msra.mxu0 %v821
        %844 = vmatprep.subr.bf16.mxu0 0
        %845 = vmatpush1.bf16.msra.mxu0 %v822
        %846 = vmatprep.subr.bf16.mxu0 0
        %847 = vmatpush1.bf16.msra.mxu0 %v823
        %848 = vmatprep.subr.bf16.mxu0 0
        %849 = vmatpush1.bf16.msra.mxu0 0
        %850 = vmatprep.subr.bf16.mxu0 0
        %851 = vmatpush1.bf16.msra.mxu0 0
        %852 = vmatprep.subr.bf16.mxu0 0
        %853 = vmatpush1.bf16.msra.mxu0 0
        %854 = vmatprep.subr.bf16.mxu0 0
        %855 = vmatpush1.bf16.msra.mxu0 0
        %856 = vmatprep.subr.bf16.mxu0 0
        %857 = vmatpush1.bf16.msra.mxu0 0
        %858 = vmatprep.subr.bf16.mxu0 0
        %859 = vmatpush1.bf16.msra.mxu0 0
        %860 = vmatprep.subr.bf16.mxu0 0
        %861 = vmatpush1.bf16.msra.mxu0 0
        %862 = vmatprep.subr.bf16.mxu0 0
        %863 = vmatpush1.bf16.msra.mxu0 0
        %864 = vmatprep.mubr.bf16.mxu0 0
        %865 = vmatmul.mubr.bf16.gmra.mrb[0].mxu0 %v759
        %v866 = vpop.f32.mrb[0].mxu0
        %v867 = vadd.f32 %v782, %v866
        %v868 = vpop.f32.mrb[0].mxu0
        %v869 = vpop.f32.mrb[0].mxu0
        %v870 = vadd.f32 %v782, %v869
        %v871 = vpop.f32.mrb[0].mxu0
        %872 = vmatprep.mubr.bf16.mxu0 0
        %873 = vmatmul.mubr.bf16.gmra.mrb[0].mxu0 %v760
        %v874 = vpop.f32.mrb[0].mxu0
        %v875 = vadd.f32 %v782, %v874
        %v876 = vpop.f32.mrb[0].mxu0
        %v877 = vpop.f32.mrb[0].mxu0
        %v878 = vadd.f32 %v782, %v877
        %v879 = vpop.f32.mrb[0].mxu0
        %880 = vdwg.mxu0
        %vm881 = vcmask 261120
        %882 = vst.msk [vmem:[%s364] sm:$0xff] %vm881, %v867
        %883 = vst.msk [vmem:[%s364 + $0x8] sm:$0xff] %vm881, %v870
        %884 = vst.msk [vmem:[%s364 + $0x10] sm:$0xff] %vm881, %v875
        %885 = vst.msk [vmem:[%s364 + $0x18] sm:$0xff] %vm881, %v878
        %s886 = smul.u32 4, %s22
        %p887 = scmp.lt.s32.totalorder %s886, 7
        %s888 = scalar_select %p887, %s886, 7
        %s889 = smul.addr %s888, 8
        %s890 = scalar_lea.vmem %s9, %s889
        // Predicated region
        $region65: #{autoencoder_apply.1} parent=55 // pred_check
          %p891 = pneg %p234
        $region66: #{autoencoder_apply.1} parent=55 // pred_check_branch
          %893 = sbr.rel (%p891) target = $region68
        $region67: #{autoencoder_apply.1} parent=55 // pred_region
          %s894 = smul.u32 4, %s22
        $region68: #{autoencoder_apply.1} parent=55 // pred_fallthru
          _
      $region56: #{autoencoder_apply.1} parent=5 // pred_fallthru
        _
      %p895 = scmp.le.s32.totalorder 2, %s17
      // Predicated region
      $region69: #{autoencoder_apply.1} parent=5 // pred_check
        %p896 = pneg %p895
      $region70: #{autoencoder_apply.1} parent=5 // pred_check_branch
        %898 = sbr.rel (%p896) target = $region72
      $region71: #{autoencoder_apply.1} parent=5 // pred_region
        %s899 = ssub.s32 %s17, 2
        // Predicated region
        $region73: #{autoencoder_apply.1} parent=71 // pred_check
          %p900 = pneg %p240
        $region74: #{autoencoder_apply.1} parent=71 // pred_check_branch
          %902 = sbr.rel (%p900) target = $region76
        $region75: #{autoencoder_apply.1} parent=71 // pred_region
          %s903 = smul.u32 4, %s23
          %p904 = scmp.lt.s32.totalorder %s903, 7
          %s905 = scalar_select %p904, %s903, 7
          %s906 = smul.addr %s905, 8
          %s907 = scalar_lea.vmem %s9, %s906
        $region76: #{autoencoder_apply.1} parent=71 // pred_fallthru
          _
      $region72: #{autoencoder_apply.1} parent=5 // pred_fallthru
        _
    $region6: #{autoencoder_apply.1} parent=1 // loop_footer
      %s21 = sadd.s32 1, %s17
    $region7: #{autoencoder_apply.1} parent=1 // loop_footer_branch
      %16 = sbr.rel target = $region3
    $region8: #{autoencoder_apply.1} parent=1 // loop_exit
      _
    %908 = vsyncpa [#allocation3], 1
    %s909 = scalar_lea.sflag [#allocation3], 1
    %910 = vsyncpa %s909, 1
    %911 = vsyncpa [#allocation5], 1

</llo_original>
